<compile_context>
chip_gen: v7x
topology: tpu7x:2x2x1
jax: 0.10.0
libtpu: 0.0.40
codegen_flags: <defaults>
</compile_context>

<pallas_src>
import numpy as np

import jax
import jax.numpy as jnp
from jax.experimental import pallas as pl
from jax.experimental.pallas import tpu as pltpu


_LANE = 128
_BN_EPS = 1e-5
_LEAKY_SLOPE = 0.1


def _round_up(x, m):
    return ((x + m - 1) // m) * m


# ---------------------------------------------------------------------------
# Kernel: one GIN layer = (A + I) @ h tiled aggregation + fused MLP epilogue.
# ---------------------------------------------------------------------------
def _make_gin_layer_kernel(num_layer_mlp, n_params):
    def kernel(*refs):
        a_ref, h_ref = refs[0], refs[1]
        param_refs = refs[2:2 + n_params]
        out_ref = refs[2 + n_params]
        acc_ref = refs[3 + n_params]

        k = pl.program_id(1)

        @pl.when(k == 0)
        def _init():
            acc_ref[...] = jnp.zeros_like(acc_ref)

        # (A + I) tile @ h tile: bf16 operands on the MXU, f32 accumulation.
        acc_ref[...] += jnp.dot(a_ref[...], h_ref[...],
                                preferred_element_type=jnp.float32)

        @pl.when(k == pl.num_programs(1) - 1)
        def _epilogue():
            z = acc_ref[...]
            for li in range(num_layer_mlp):
                w = param_refs[2 * li][...]
                b = param_refs[2 * li + 1][...]
                z = jnp.dot(z, w, preferred_element_type=jnp.float32) + b
                if li < num_layer_mlp - 1:
                    # BatchNorm (eval) is folded into (w, b); only leaky_relu remains.
                    z = jnp.where(z >= 0, z, _LEAKY_SLOPE * z)
            out_ref[...] = z.astype(out_ref.dtype)

    return kernel


def _gin_layer_call(a_bf16, h_bf16, layer_params, *, tile, num_layer_mlp):
    n_pad = a_bf16.shape[0]
    c_in_pad = h_bf16.shape[1]
    out_pad = layer_params[-2].shape[1]          # last Linear's padded out dim
    grid = (n_pad // tile, n_pad // tile)

    kernel = _make_gin_layer_kernel(num_layer_mlp, len(layer_params))

    in_specs = [
        pl.BlockSpec((tile, tile), lambda i, k: (i, k)),       # A tile (row, src)
        pl.BlockSpec((tile, c_in_pad), lambda i, k: (k, 0)),   # h tile (src rows)
    ]
    # Small BN-folded weights: full-array blocks, resident across the grid.
    in_specs += [pl.BlockSpec(p.shape, lambda i, k: (0, 0)) for p in layer_params]

    out_specs = pl.BlockSpec((tile, out_pad), lambda i, k: (i, 0))

    # Cost estimate: aggregation + MLP flops, dominant HBM traffic.
    flops = 2 * n_pad * n_pad * c_in_pad
    for li in range(num_layer_mlp):
        w = layer_params[2 * li]
        flops += 2 * n_pad * w.shape[0] * w.shape[1]
    param_bytes = sum(int(p.size) * p.dtype.itemsize for p in layer_params)
    bytes_accessed = (int(a_bf16.size) * 2 + grid[0] * int(h_bf16.size) * 2
                      + n_pad * out_pad * 4 + param_bytes)

    # VMEM budget: double-buffered blocks + accumulator + resident params,
    # with margin, capped at 32 MiB so it is safe on v7x's 64 MiB physical VMEM.
    need = (2 * (tile * tile * 2 + tile * c_in_pad * 2 + tile * out_pad * 4)
            + tile * c_in_pad * 4 + 2 * param_bytes)
    vmem_limit = int(min(max(2 * need, 4 << 20), 32 << 20))

    return pl.pallas_call(
        kernel,
        out_shape=jax.ShapeDtypeStruct((n_pad, out_pad), jnp.float32),
        grid=grid,
        in_specs=in_specs,
        out_specs=out_specs,
        scratch_shapes=[pltpu.VMEM((tile, c_in_pad), jnp.float32)],
        compiler_params=pltpu.CompilerParams(
            dimension_semantics=("parallel", "arbitrary"),
            vmem_limit_bytes=vmem_limit),
        cost_estimate=pl.CostEstimate(flops=int(flops), transcendentals=0,
                                      bytes_accessed=int(bytes_accessed)),
    )(a_bf16, h_bf16, *layer_params)


# ---------------------------------------------------------------------------
# Wrapper: dense adjacency (+ folded self term), padding, per-layer calls.
# ---------------------------------------------------------------------------
def gin_extractor_forward(x, edge_index, folded_params, *, num_layer_gin,
                          num_layer_mlp, hidden_channels, tile=128):
    """x: (N, C) f32, edge_index: (2, E) i32 rows = [src; dst]."""
    n, c_in = x.shape
    n_pad = _round_up(max(n, tile), tile)
    c_in_pad = _round_up(c_in, _LANE)

    # Dense adjacency (duplicate edges accumulate); fold the GIN self term
    # (1 + eps) * x with eps = 0 into the adjacency:  A <- A + I.
    src, dst = edge_index[0], edge_index[1]
    a = jnp.zeros((n_pad, n_pad), jnp.float32).at[dst, src].add(1.0)
    a = a + jnp.eye(n_pad, dtype=jnp.float32)
    a = a.astype(jnp.bfloat16)           # 0/1/small-int entries: exact in bf16

    h = jnp.zeros((n_pad, c_in_pad), jnp.float32).at[:n, :c_in].set(x)

    per_layer = 2 * num_layer_mlp
    for layer in range(num_layer_gin):
        lp = folded_params[layer * per_layer:(layer + 1) * per_layer]
        h = _gin_layer_call(a, h.astype(jnp.bfloat16), lp,
                            tile=tile, num_layer_mlp=num_layer_mlp)
    return h[:n, :hidden_channels]


# ---------------------------------------------------------------------------
# Synthetic parameters (PyTorch layout), BN folding / padding, f32 reference.
# ---------------------------------------------------------------------------
def _init_mlp_raw(key, in_ch, hidden_ch, out_ch, num_layers):
    """PyTorch-layout synthetic params: Linear weight (out, in), bias (out,);
    BatchNorm1d gamma/beta/running_mean/running_var (features,)."""
    dims = [in_ch] + [hidden_ch] * (num_layers - 1) + [out_ch]
    layers = []
    for li in range(num_layers):
        key, kw, kb, kg, kbt, km, kv = jax.random.split(key, 7)
        fi, fo = dims[li], dims[li + 1]
        bound = 1.0 / (fi ** 0.5)
        layer = {
            "w": jax.random.uniform(kw, (fo, fi), jnp.float32, -bound, bound),
            "b": jax.random.uniform(kb, (fo,), jnp.float32, -bound, bound),
        }
        if li < num_layers - 1:
            layer["gamma"] = 1.0 + 0.1 * jax.random.normal(kg, (fo,), jnp.float32)
            layer["beta"] = 0.1 * jax.random.normal(kbt, (fo,), jnp.float32)
            layer["mean"] = 0.1 * jax.random.normal(km, (fo,), jnp.float32)
            layer["var"] = jnp.abs(jax.random.normal(kv, (fo,), jnp.float32)) + 0.5
        layers.append(layer)
    return key, layers


def _fold_and_pad_mlp(raw_layers):
    """Fold eval-mode BatchNorm into the preceding Linear and zero-pad every
    feature dim to a multiple of 128.  Returns flat [W1', b1', W2', b2', ...]
    with W stored (in, out) so the kernel computes h @ W + b."""
    flat = []
    for layer in raw_layers:
        w = layer["w"].T                      # (in, out)
        b = layer["b"]
        if "gamma" in layer:
            scale = layer["gamma"] / jnp.sqrt(layer["var"] + _BN_EPS)
            shift = layer["beta"] - layer["mean"] * scale
            w = w * scale[None, :]
            b = b * scale + shift
        in_p = _round_up(w.shape[0], _LANE)
        out_p = _round_up(w.shape[1], _LANE)
        w_pad = jnp.zeros((in_p, out_p), jnp.float32).at[:w.shape[0], :w.shape[1]].set(w)
        b_pad = jnp.zeros((1, out_p), jnp.float32).at[0, :b.shape[0]].set(b)
        flat += [w_pad, b_pad]
    return flat


def _reference_forward(x, edge_index, gin_raw_layers):
    """Pure-JAX f32 reference matching GINExtractor.forward (eval mode)."""
    n = x.shape[0]
    src, dst = edge_index[0], edge_index[1]
    a = jnp.zeros((n, n), jnp.float32).at[dst, src].add(1.0)
    h = x
    for raw_layers in gin_raw_layers:
        z = h + a @ h                                   # GINConv aggregation, eps=0
        for li, layer in enumerate(raw_layers):
            z = z @ layer["w"].T + layer["b"]
            if li < len(raw_layers) - 1:
                zn = (z - layer["mean"]) / jnp.sqrt(layer["var"] + _BN_EPS)
                z = zn * layer["gamma"] + layer["beta"]
                z = jnp.where(z >= 0, z, _LEAKY_SLOPE * z)
        h = z
    return h


if __name__ == "__main__":
    # Small config consistent with GINExtractor.__init__.
    input_channels = 8
    hidden_channels = 32
    num_layer_mlp = 2
    num_layer_gin = 2

    num_nodes = 200        # padded to 256 -> exercises a (2, 2) tiled grid
    num_edges = 800

    key = jax.random.PRNGKey(0)
    key, kx, ke = jax.random.split(key, 3)

    x = jax.random.normal(kx, (num_nodes, input_channels), jnp.float32)
    edge_index = jax.random.randint(ke, (2, num_edges), 0, num_nodes, jnp.int32)

    gin_raw_layers = []
    folded_params = []
    for layer in range(num_layer_gin):
        in_ch = input_channels if layer == 0 else hidden_channels
        key, raw = _init_mlp_raw(key, in_ch, hidden_channels, hidden_channels,
                                 num_layer_mlp)
        gin_raw_layers.append(raw)
        folded_params += _fold_and_pad_mlp(raw)

    out = gin_extractor_forward(
        x, edge_index, folded_params,
        num_layer_gin=num_layer_gin,
        num_layer_mlp=num_layer_mlp,
        hidden_channels=hidden_channels,
        tile=128,
    )
    out = jax.block_until_ready(out)
    assert out.shape == (num_nodes, hidden_channels)

    # Correctness check against a pure-JAX f32 reference (loose tolerance for
    # the bf16 MXU aggregation path).
    ref = jax.block_until_ready(_reference_forward(x, edge_index, gin_raw_layers))
    np.testing.assert_allclose(np.asarray(out), np.asarray(ref),
                               rtol=5e-2, atol=5e-2)
    print("KERNEL_OK")
</pallas_src>

<mosaic_0001>
module attributes {stable_mosaic.version = 11 : i64} {
  func.func @kernel(%arg0: i32, %arg1: i32, %arg2: memref<128x128xbf16, #tpu.memory_space<vmem>>, %arg3: memref<128x128xbf16, #tpu.memory_space<vmem>>, %arg4: memref<128x128xf32, #tpu.memory_space<vmem>>, %arg5: memref<1x128xf32, #tpu.memory_space<vmem>>, %arg6: memref<128x128xf32, #tpu.memory_space<vmem>>, %arg7: memref<1x128xf32, #tpu.memory_space<vmem>>, %arg8: memref<128x128xf32, #tpu.memory_space<vmem>>, %arg9: memref<128x128xf32, #tpu.memory_space<vmem>>) attributes {dimension_semantics = [#tpu.dimension_semantics<parallel>, #tpu.dimension_semantics<arbitrary>], iteration_bounds = array<i64: 2, 2>, scalar_prefetch = 0 : i64, scratch_operands = 1 : i64, tpu.core_type = #tpu.core_type<tc>, window_params = [{transform_indices = @transform_0, window_bounds = array<i64: 128, 128>}, {transform_indices = @transform_1, window_bounds = array<i64: 128, 128>}, {pipeline_mode = #tpu.pipeline_mode<synchronous>, transform_indices = @transform_2, window_bounds = array<i64: 128, 128>}, {pipeline_mode = #tpu.pipeline_mode<synchronous>, transform_indices = @transform_3, window_bounds = array<i64: 1, 128>}, {pipeline_mode = #tpu.pipeline_mode<synchronous>, transform_indices = @transform_4, window_bounds = array<i64: 128, 128>}, {pipeline_mode = #tpu.pipeline_mode<synchronous>, transform_indices = @transform_5, window_bounds = array<i64: 1, 128>}, {transform_indices = @transform_6, window_bounds = array<i64: 128, 128>}]} {
    %c0_i32 = arith.constant 0 : i32
    %0 = arith.cmpi eq, %arg1, %c0_i32 : i32
    %1 = arith.extui %0 : i1 to i32
    %c0_i32_0 = arith.constant 0 : i32
    %2 = arith.cmpi ne, %1, %c0_i32_0 : i32
    scf.if %2 {
      %cst_9 = arith.constant 0.000000e+00 : f32
      %12 = vector.broadcast %cst_9 : f32 to vector<128x128xf32>
      %c0_10 = arith.constant 0 : index
      %c0_11 = arith.constant 0 : index
      %13 = vector.load %arg9[%c0_10, %c0_11] : memref<128x128xf32, #tpu.memory_space<vmem>>, vector<128x128xf32>
      tpu.vector_store %arg9[%c0_10, %c0_11], %12 {strides = array<i32>} : memref<128x128xf32, #tpu.memory_space<vmem>>, vector<128x128xf32>,
    } else {
    }
    %c0 = arith.constant 0 : index
    %c0_1 = arith.constant 0 : index
    %3 = vector.load %arg9[%c0, %c0_1] : memref<128x128xf32, #tpu.memory_space<vmem>>, vector<128x128xf32>
    %c0_2 = arith.constant 0 : index
    %c0_3 = arith.constant 0 : index
    %4 = vector.load %arg2[%c0_2, %c0_3] : memref<128x128xbf16, #tpu.memory_space<vmem>>, vector<128x128xbf16>
    %c0_4 = arith.constant 0 : index
    %c0_5 = arith.constant 0 : index
    %5 = vector.load %arg3[%c0_4, %c0_5] : memref<128x128xbf16, #tpu.memory_space<vmem>>, vector<128x128xbf16>
    %cst = arith.constant dense<0.000000e+00> : vector<128x128xf32>
    %6 = tpu.matmul %4, %5, %cst {dimension_numbers = #tpu.dot_dimension_numbers<[1], [0], [0], [1], [0, 0, 1, 1], [], []>} : vector<128x128xbf16>, vector<128x128xbf16>, vector<128x128xf32> -> vector<128x128xf32>
    %7 = arith.addf %3, %6 : vector<128x128xf32>
    %c0_6 = arith.constant 0 : index
    %c0_7 = arith.constant 0 : index
    %8 = vector.load %arg9[%c0_6, %c0_7] : memref<128x128xf32, #tpu.memory_space<vmem>>, vector<128x128xf32>
    tpu.vector_store %arg9[%c0_6, %c0_7], %7 {strides = array<i32>} : memref<128x128xf32, #tpu.memory_space<vmem>>, vector<128x128xf32>,
    %c1_i32 = arith.constant 1 : i32
    %9 = arith.cmpi eq, %arg1, %c1_i32 : i32
    %10 = arith.extui %9 : i1 to i32
    %c0_i32_8 = arith.constant 0 : i32
    %11 = arith.cmpi ne, %10, %c0_i32_8 : i32
    scf.if %11 {
      %c0_9 = arith.constant 0 : index
      %c0_10 = arith.constant 0 : index
      %12 = vector.load %arg9[%c0_9, %c0_10] : memref<128x128xf32, #tpu.memory_space<vmem>>, vector<128x128xf32>
      %c0_11 = arith.constant 0 : index
      %c0_12 = arith.constant 0 : index
      %13 = vector.load %arg4[%c0_11, %c0_12] : memref<128x128xf32, #tpu.memory_space<vmem>>, vector<128x128xf32>
      %c0_13 = arith.constant 0 : index
      %c0_14 = arith.constant 0 : index
      %14 = vector.load %arg5[%c0_13, %c0_14] : memref<1x128xf32, #tpu.memory_space<vmem>>, vector<1x128xf32>
      %cst_15 = arith.constant dense<0.000000e+00> : vector<128x128xf32>
      %15 = tpu.matmul %12, %13, %cst_15 {dimension_numbers = #tpu.dot_dimension_numbers<[1], [0], [0], [1], [0, 0, 1, 1], [], []>} : vector<128x128xf32>, vector<128x128xf32>, vector<128x128xf32> -> vector<128x128xf32>
      %16 = vector.broadcast %14 : vector<1x128xf32> to vector<128x128xf32>
      %17 = arith.addf %15, %16 : vector<128x128xf32>
      %cst_16 = arith.constant 0.000000e+00 : f32
      %18 = vector.broadcast %cst_16 : f32 to vector<128x128xf32>
      %19 = arith.cmpf oge, %17, %18 : vector<128x128xf32>
      %cst_17 = arith.constant 1.000000e-01 : f32
      %20 = vector.broadcast %cst_17 : f32 to vector<128x128xf32>
      %21 = arith.mulf %20, %17 : vector<128x128xf32>
      %22 = arith.select %19, %17, %21 : vector<128x128xi1>, vector<128x128xf32>
      %c0_18 = arith.constant 0 : index
      %c0_19 = arith.constant 0 : index
      %23 = vector.load %arg6[%c0_18, %c0_19] : memref<128x128xf32, #tpu.memory_space<vmem>>, vector<128x128xf32>
      %c0_20 = arith.constant 0 : index
      %c0_21 = arith.constant 0 : index
      %24 = vector.load %arg7[%c0_20, %c0_21] : memref<1x128xf32, #tpu.memory_space<vmem>>, vector<1x128xf32>
      %cst_22 = arith.constant dense<0.000000e+00> : vector<128x128xf32>
      %25 = tpu.matmul %22, %23, %cst_22 {dimension_numbers = #tpu.dot_dimension_numbers<[1], [0], [0], [1], [0, 0, 1, 1], [], []>} : vector<128x128xf32>, vector<128x128xf32>, vector<128x128xf32> -> vector<128x128xf32>
      %26 = vector.broadcast %24 : vector<1x128xf32> to vector<128x128xf32>
      %27 = arith.addf %25, %26 : vector<128x128xf32>
      %c0_23 = arith.constant 0 : index
      %c0_24 = arith.constant 0 : index
      %28 = vector.load %arg8[%c0_23, %c0_24] : memref<128x128xf32, #tpu.memory_space<vmem>>, vector<128x128xf32>
      tpu.vector_store %arg8[%c0_23, %c0_24], %27 {strides = array<i32>} : memref<128x128xf32, #tpu.memory_space<vmem>>, vector<128x128xf32>,
    } else {
    }
    return
  }
  func.func @transform_0(%arg0: i32, %arg1: i32) -> (i32, i32) {
    %c0_i32 = arith.constant 0 : i32
    return %arg0, %arg1 : i32, i32
  }
  func.func @transform_1(%arg0: i32, %arg1: i32) -> (i32, i32) {
    %c0_i32 = arith.constant 0 : i32
    %c0_i32_0 = arith.constant 0 : i32
    return %arg1, %c0_i32 : i32, i32
  }
  func.func @transform_2(%arg0: i32, %arg1: i32) -> (i32, i32) {
    %c0_i32 = arith.constant 0 : i32
    %c0_i32_0 = arith.constant 0 : i32
    %c0_i32_1 = arith.constant 0 : i32
    return %c0_i32, %c0_i32_0 : i32, i32
  }
  func.func @transform_3(%arg0: i32, %arg1: i32) -> (i32, i32) {
    %c0_i32 = arith.constant 0 : i32
    %c0_i32_0 = arith.constant 0 : i32
    %c0_i32_1 = arith.constant 0 : i32
    return %c0_i32, %c0_i32_0 : i32, i32
  }
  func.func @transform_4(%arg0: i32, %arg1: i32) -> (i32, i32) {
    %c0_i32 = arith.constant 0 : i32
    %c0_i32_0 = arith.constant 0 : i32
    %c0_i32_1 = arith.constant 0 : i32
    return %c0_i32, %c0_i32_0 : i32, i32
  }
  func.func @transform_5(%arg0: i32, %arg1: i32) -> (i32, i32) {
    %c0_i32 = arith.constant 0 : i32
    %c0_i32_0 = arith.constant 0 : i32
    %c0_i32_1 = arith.constant 0 : i32
    return %c0_i32, %c0_i32_0 : i32, i32
  }
  func.func @transform_6(%arg0: i32, %arg1: i32) -> (i32, i32) {
    %c0_i32 = arith.constant 0 : i32
    %c0_i32_0 = arith.constant 0 : i32
    return %arg0, %c0_i32 : i32, i32
  }
}

</mosaic_0001>

<llo_original>
// kernel: tpu_custom_call.1
$region0: #{tpu_custom_call.1}
  #allocation0 [shape = 'u32[]', space=smem, size = 0x4, offset = 0x4, fixed_abs, tag = 'smem constant byte address 0x4 - core index']
  #allocation1 [shape = 'u32[144,128]{1,0:T(1,128)}', space=vmem, size = 0x12000, scoped, tag = 'internal scratch']
  #allocation2 [shape = 'f32[128,128]{1,0:T(8,128)}', space=vmem, size = 0x10000, scoped, tag = 'scratch operand']
  %s0 = inlined_call_operand.hbm [shape: bf16[256,256], index: 0, kind: input, shape index: {}]
  %s1 = inlined_call_operand.hbm [shape: bf16[256,128], index: 1, kind: input, shape index: {}]
  %s2 = inlined_call_operand.hbm [shape: f32[128,128], index: 2, kind: input, shape index: {}]
  %s3 = inlined_call_operand.vmem [shape: f32[1,128], index: 3, kind: input, shape index: {}]
  %s4 = inlined_call_operand.hbm [shape: f32[128,128], index: 4, kind: input, shape index: {}]
  %s5 = inlined_call_operand.vmem [shape: f32[1,128], index: 5, kind: input, shape index: {}]
  %s6 = inlined_call_operand.hbm [shape: f32[256,128], index: 6, kind: output, shape index: {}]
  %s7 = sld [smem:[#allocation0]]
  $region81: #{tpu_custom_call.1} parent=0
    _
  %s9 = ssub.s32 1, %s7
  %s10 = scalar_select 0, %s9, %s7
  $region1: #{tpu_custom_call.1} parent=0
    #allocation3 [shape = 'u8[65536]{0}', space=vmem, size = 0x10000, scoped, tag = 'input window, operand 0']
    #allocation4 [shape = 's32[2]{0}', space=sflag, size = 0x8, scoped, tag = 'scoped memory for tpu_custom_call.1']
    #allocation5 [shape = 's32[2]{0}', space=sflag, size = 0x8, scoped, tag = 'scoped memory for tpu_custom_call.1']
    #allocation6 [shape = 'u8[65536]{0}', space=vmem, size = 0x10000, scoped, tag = 'input window, operand 1']
    #allocation7 [shape = 's32[2]{0}', space=sflag, size = 0x8, scoped, tag = 'scoped memory for tpu_custom_call.1']
    #allocation8 [shape = 'u8[65536]{0}', space=vmem, size = 0x10000, scoped, tag = 'input window, operand 2, single buffered']
    #allocation9 [shape = 'u8[65536]{0}', space=vmem, size = 0x10000, scoped, tag = 'input window, operand 4, single buffered']
    #allocation10 [shape = 's32[1]{0}', space=sflag, size = 0x4, scoped, tag = 'scoped memory for tpu_custom_call.1']
    #allocation11 [shape = 'u8[131072]{0}', space=vmem, size = 0x20000, scoped, tag = 'output window, operand 0']
    %11 = vsyncpa [#allocation4], 0
    %s12 = scalar_lea.sflag [#allocation4], 1
    %13 = vsyncpa %s12, 0
    %14 = vsyncpa [#allocation7], 0
    %s15 = scalar_lea.sflag [#allocation7], 1
    %16 = vsyncpa %s15, 0
    %17 = vsyncpa [#allocation10], 0
    %18 = vsyncpa [#allocation5], 0
    %s19 = scalar_lea.sflag [#allocation5], 1
    %20 = vsyncpa %s19, 0
    loop: start=0, step=1, limit=6
    $region2: #{tpu_custom_call.1} parent=1 // loop_pre_header
      _
    $region3: #{tpu_custom_call.1} parent=1 // loop_header
      %s22 = sphi 0, %s26
      %p23 = scmp.ge.s32.totalorder %s22, 6
      %s29 = sphi 0, %s41
      %s30 = sphi 0, %s37
      %s31 = sphi 0, %s29
      %s32 = sphi 0, %s30
      %s33 = sphi 0, %s31
      %s34 = sphi 0, %s32
      %s46 = sphi 0, %s48
      %s49 = sphi 0, %s46
      %s50 = sphi 0, %s49
      %s66 = sphi 0, %s50
      %s72 = sphi 0, %s74
      %s75 = sphi 0, %s72
      %s76 = sphi 0, %s75
      %s92 = sphi 0, %s76
      %s96 = sphi 0, %s96
      %s98 = sphi 0, %s96
      %s99 = sphi 0, %s98
      %s113 = sphi 0, %s99
      %s117 = sphi 0, %s117
      %s119 = sphi 0, %s117
      %s120 = sphi 0, %s119
      %s134 = sphi 0, %s120
      %s138 = sphi 0, %s138
      %s140 = sphi 0, %s138
      %s141 = sphi 0, %s140
      %s155 = sphi 0, %s141
      %s159 = sphi 0, %s159
      %s161 = sphi 0, %s159
      %s162 = sphi 0, %s161
      %s176 = sphi 0, %s162
      %s182 = sphi 0, %s184
      %s185 = sphi 0, %s182
      %s186 = sphi 0, %s185
      %s202 = sphi 0, %s186
    $region4: #{tpu_custom_call.1} parent=1 // loop_header_branch
      %25 = sbr.rel (%p23) target = $region8
    $region5: #{tpu_custom_call.1} parent=1 // loop_body
      %s27 = ssub.s32 %s22, 1
      %s28 = ssub.s32 %s22, 2
      %s35 = sadd.s32 1, %s30
      %p36 = scmp.ge.s32.totalorder %s35, 2
      %s37 = scalar_select %p36, 0, %s35
      %s38 = sadd.s32 1, %s29
      %s39 = scalar_select %p36, %s38, %s29
      %p40 = scmp.ge.s32.totalorder %s39, 2
      %s41 = scalar_select %p40, 0, %s39
      %s42 = ssub.s32 %s29, %s41
      %s43 = ssub.s32 %s30, %s37
      %s44 = sor.u32 %s42, %s43
      %p45 = scmp.eq.s32.totalorder %s44, 0
      %s47 = sadd.s32 %s46, 1
      %s48 = scalar_select %p45, %s46, %s47
      %p51 = pneg %p45
      %p52 = scmp.eq.s32.totalorder %s22, 3
      %p53 = por %p51, %p52
      %p54 = scmp.ne.s32.totalorder %s46, %s49
      %p55 = scmp.eq.s32.totalorder %s22, 0
      %p56 = por %p54, %p55
      %p57 = scmp.ne.s32.totalorder %s46, %s49
      %p58 = scmp.eq.s32.totalorder %s27, 3
      %p59 = por %p57, %p58
      %p60 = scmp.ne.s32.totalorder %s49, %s50
      %p61 = scmp.eq.s32.totalorder %s27, 0
      %p62 = por %p60, %p61
      %p63 = scmp.ne.s32.totalorder %s49, %s50
      %p64 = scmp.eq.s32.totalorder %s28, 3
      %p65 = por %p63, %p64
      %p67 = scmp.ne.s32.totalorder %s50, %s66
      %p68 = scmp.eq.s32.totalorder %s28, 0
      %p69 = por %p67, %p68
      %s70 = ssub.s32 %s30, %s37
      %p71 = scmp.eq.s32.totalorder %s70, 0
      %s73 = sadd.s32 %s72, 1
      %s74 = scalar_select %p71, %s72, %s73
      %p77 = pneg %p71
      %p78 = scmp.eq.s32.totalorder %s22, 3
      %p79 = por %p77, %p78
      %p80 = scmp.ne.s32.totalorder %s72, %s75
      %p81 = scmp.eq.s32.totalorder %s22, 0
      %p82 = por %p80, %p81
      %p83 = scmp.ne.s32.totalorder %s72, %s75
      %p84 = scmp.eq.s32.totalorder %s27, 3
      %p85 = por %p83, %p84
      %p86 = scmp.ne.s32.totalorder %s75, %s76
      %p87 = scmp.eq.s32.totalorder %s27, 0
      %p88 = por %p86, %p87
      %p89 = scmp.ne.s32.totalorder %s75, %s76
      %p90 = scmp.eq.s32.totalorder %s28, 3
      %p91 = por %p89, %p90
      %p93 = scmp.ne.s32.totalorder %s76, %s92
      %p94 = scmp.eq.s32.totalorder %s28, 0
      %p95 = por %p93, %p94
      %s97 = sadd.s32 %s96, 1
      %p100 = scmp.eq.s32.totalorder %s22, 3
      %p101 = scmp.ne.s32.totalorder %s96, %s98
      %p102 = scmp.eq.s32.totalorder %s22, 0
      %p103 = por %p101, %p102
      %p104 = scmp.ne.s32.totalorder %s96, %s98
      %p105 = scmp.eq.s32.totalorder %s27, 3
      %p106 = por %p104, %p105
      %p107 = scmp.ne.s32.totalorder %s98, %s99
      %p108 = scmp.eq.s32.totalorder %s27, 0
      %p109 = por %p107, %p108
      %p110 = scmp.ne.s32.totalorder %s98, %s99
      %p111 = scmp.eq.s32.totalorder %s28, 3
      %p112 = por %p110, %p111
      %p114 = scmp.ne.s32.totalorder %s99, %s113
      %p115 = scmp.eq.s32.totalorder %s28, 0
      %p116 = por %p114, %p115
      %s118 = sadd.s32 %s117, 1
      %p121 = scmp.eq.s32.totalorder %s22, 3
      %p122 = scmp.ne.s32.totalorder %s117, %s119
      %p123 = scmp.eq.s32.totalorder %s22, 0
      %p124 = por %p122, %p123
      %p125 = scmp.ne.s32.totalorder %s117, %s119
      %p126 = scmp.eq.s32.totalorder %s27, 3
      %p127 = por %p125, %p126
      %p128 = scmp.ne.s32.totalorder %s119, %s120
      %p129 = scmp.eq.s32.totalorder %s27, 0
      %p130 = por %p128, %p129
      %p131 = scmp.ne.s32.totalorder %s119, %s120
      %p132 = scmp.eq.s32.totalorder %s28, 3
      %p133 = por %p131, %p132
      %p135 = scmp.ne.s32.totalorder %s120, %s134
      %p136 = scmp.eq.s32.totalorder %s28, 0
      %p137 = por %p135, %p136
      %s139 = sadd.s32 %s138, 1
      %p142 = scmp.eq.s32.totalorder %s22, 3
      %p143 = scmp.ne.s32.totalorder %s138, %s140
      %p144 = scmp.eq.s32.totalorder %s22, 0
      %p145 = por %p143, %p144
      %p146 = scmp.ne.s32.totalorder %s138, %s140
      %p147 = scmp.eq.s32.totalorder %s27, 3
      %p148 = por %p146, %p147
      %p149 = scmp.ne.s32.totalorder %s140, %s141
      %p150 = scmp.eq.s32.totalorder %s27, 0
      %p151 = por %p149, %p150
      %p152 = scmp.ne.s32.totalorder %s140, %s141
      %p153 = scmp.eq.s32.totalorder %s28, 3
      %p154 = por %p152, %p153
      %p156 = scmp.ne.s32.totalorder %s141, %s155
      %p157 = scmp.eq.s32.totalorder %s28, 0
      %p158 = por %p156, %p157
      %s160 = sadd.s32 %s159, 1
      %p163 = scmp.eq.s32.totalorder %s22, 3
      %p164 = scmp.ne.s32.totalorder %s159, %s161
      %p165 = scmp.eq.s32.totalorder %s22, 0
      %p166 = por %p164, %p165
      %p167 = scmp.ne.s32.totalorder %s159, %s161
      %p168 = scmp.eq.s32.totalorder %s27, 3
      %p169 = por %p167, %p168
      %p170 = scmp.ne.s32.totalorder %s161, %s162
      %p171 = scmp.eq.s32.totalorder %s27, 0
      %p172 = por %p170, %p171
      %p173 = scmp.ne.s32.totalorder %s161, %s162
      %p174 = scmp.eq.s32.totalorder %s28, 3
      %p175 = por %p173, %p174
      %p177 = scmp.ne.s32.totalorder %s162, %s176
      %p178 = scmp.eq.s32.totalorder %s28, 0
      %p179 = por %p177, %p178
      %s180 = ssub.s32 %s29, %s41
      %p181 = scmp.eq.s32.totalorder %s180, 0
      %s183 = sadd.s32 %s182, 1
      %s184 = scalar_select %p181, %s182, %s183
      %p187 = pneg %p181
      %p188 = scmp.eq.s32.totalorder %s22, 3
      %p189 = por %p187, %p188
      %p190 = scmp.ne.s32.totalorder %s182, %s185
      %p191 = scmp.eq.s32.totalorder %s22, 0
      %p192 = por %p190, %p191
      %p193 = scmp.ne.s32.totalorder %s182, %s185
      %p194 = scmp.eq.s32.totalorder %s27, 3
      %p195 = por %p193, %p194
      %p196 = scmp.ne.s32.totalorder %s185, %s186
      %p197 = scmp.eq.s32.totalorder %s27, 0
      %p198 = por %p196, %p197
      %p199 = scmp.ne.s32.totalorder %s185, %s186
      %p200 = scmp.eq.s32.totalorder %s28, 3
      %p201 = por %p199, %p200
      %p203 = scmp.ne.s32.totalorder %s186, %s202
      %p204 = scmp.eq.s32.totalorder %s28, 0
      %p205 = por %p203, %p204
      %p206 = scmp.le.s32.totalorder 1, %s22
      %p207 = scmp.lt.s32.totalorder %s22, 5
      %p208 = pnand %p206, %p207
      %p209 = pneg %p208
      // Predicated region
      $region9: #{tpu_custom_call.1} parent=5 // pred_check
        _
      $region10: #{tpu_custom_call.1} parent=5 // pred_check_branch
        %211 = sbr.rel (%p208) target = $region12
      $region11: #{tpu_custom_call.1} parent=5 // pred_region
        %s212 = ssub.s32 %s22, 1
        // Predicated region
        $region13: #{tpu_custom_call.1} parent=11 // pred_check
          %p213 = pneg %p109
        $region14: #{tpu_custom_call.1} parent=11 // pred_check_branch
          %215 = sbr.rel (%p213) target = $region16
        $region15: #{tpu_custom_call.1} parent=11 // pred_region
          %s217 = ssub.s32 2048, 2048
          %218 = vsyncadd [#allocation7], %s217
          %s219 = sshll.u32 [#allocation8], 4
          %s220 = int_to_ptr.vmem [resolvable:$true] %s219
          %225 = dma.hbm_to_vmem [thread:$0]  %s2, 2048, %s220, [#allocation7], 128, 128, 8
        $region16: #{tpu_custom_call.1} parent=11 // pred_fallthru
          _
        // Predicated region
        $region17: #{tpu_custom_call.1} parent=11 // pred_check
          %p226 = pneg %p130
        $region18: #{tpu_custom_call.1} parent=11 // pred_check_branch
          %228 = sbr.rel (%p226) target = $region20
        $region19: #{tpu_custom_call.1} parent=11 // pred_region
          _
        $region20: #{tpu_custom_call.1} parent=11 // pred_fallthru
          _
        // Predicated region
        $region21: #{tpu_custom_call.1} parent=11 // pred_check
          %p229 = pneg %p151
        $region22: #{tpu_custom_call.1} parent=11 // pred_check_branch
          %231 = sbr.rel (%p229) target = $region24
        $region23: #{tpu_custom_call.1} parent=11 // pred_region
          %s233 = ssub.s32 2048, 2048
          %234 = vsyncadd [#allocation10], %s233
          %s235 = sshll.u32 [#allocation9], 4
          %s236 = int_to_ptr.vmem [resolvable:$true] %s235
          %241 = dma.hbm_to_vmem [thread:$0]  %s4, 2048, %s236, [#allocation10], 128, 128, 8
        $region24: #{tpu_custom_call.1} parent=11 // pred_fallthru
          _
        // Predicated region
        $region25: #{tpu_custom_call.1} parent=11 // pred_check
          %p242 = pneg %p172
        $region26: #{tpu_custom_call.1} parent=11 // pred_check_branch
          %244 = sbr.rel (%p242) target = $region28
        $region27: #{tpu_custom_call.1} parent=11 // pred_region
          _
        $region28: #{tpu_custom_call.1} parent=11 // pred_fallthru
          _
      $region12: #{tpu_custom_call.1} parent=5 // pred_fallthru
        _
      %p245 = scmp.lt.s32.totalorder %s22, 4
      // Predicated region
      $region29: #{tpu_custom_call.1} parent=5 // pred_check
        %p246 = pneg %p245
      $region30: #{tpu_custom_call.1} parent=5 // pred_check_branch
        %248 = sbr.rel (%p246) target = $region32
      $region31: #{tpu_custom_call.1} parent=5 // pred_region
        // Predicated region
        $region33: #{tpu_custom_call.1} parent=31 // pred_check
          %p249 = pneg %p56
        $region34: #{tpu_custom_call.1} parent=31 // pred_check_branch
          %251 = sbr.rel (%p249) target = $region36
        $region35: #{tpu_custom_call.1} parent=31 // pred_region
          %s252 = sand.u32 %s46, 1
          %s253 = scalar_lea.sflag [#allocation4], %s252
          %s254 = sand.u32 %s46, 1
          %s255 = smul.addr %s254, 64
          %s256 = scalar_lea.vmem [#allocation3], %s255
          %s257 = smul.u32 16, %s29
          %s259 = ssub.s32 1024, 1024
          %260 = vsyncadd %s253, %s259
          %s261 = smul.addr %s257, 2
          %s262 = sadd.s32 %s30, %s261
          %s263 = smul.addr %s262, 64
          %s264 = scalar_lea.hbm %s0, %s263
          %s265 = sshll.u32 %s256, 4
          %s266 = int_to_ptr.vmem [resolvable:$true] %s265
          %271 = dma.hbm_to_vmem [thread:$0]  %s264, 1024, %s266, %s253, 128, 64, 4
        $region36: #{tpu_custom_call.1} parent=31 // pred_fallthru
          _
        // Predicated region
        $region37: #{tpu_custom_call.1} parent=31 // pred_check
          %p272 = pneg %p82
        $region38: #{tpu_custom_call.1} parent=31 // pred_check_branch
          %274 = sbr.rel (%p272) target = $region40
        $region39: #{tpu_custom_call.1} parent=31 // pred_region
          %s275 = sand.u32 %s22, 1
          %s276 = scalar_lea.sflag [#allocation7], %s275
          %s277 = sand.u32 %s72, 1
          %s278 = smul.addr %s277, 64
          %s279 = scalar_lea.vmem [#allocation6], %s278
          %s280 = smul.u32 16, %s30
          %s282 = ssub.s32 1024, 1024
          %283 = vsyncadd %s276, %s282
          %s284 = smul.addr %s280, 64
          %s285 = scalar_lea.hbm %s1, %s284
          %s286 = sshll.u32 %s279, 4
          %s287 = int_to_ptr.vmem [resolvable:$true] %s286
          %292 = dma.hbm_to_vmem [thread:$0]  %s285, 1024, %s287, %s276, 64, 64, 4
        $region40: #{tpu_custom_call.1} parent=31 // pred_fallthru
          _
      $region32: #{tpu_custom_call.1} parent=5 // pred_fallthru
        _
      %p293 = scmp.le.s32.totalorder 1, %s22
      %p294 = scmp.lt.s32.totalorder %s22, 5
      %p295 = pnand %p293, %p294
      %p296 = pneg %p295
      // Predicated region
      $region41: #{tpu_custom_call.1} parent=5 // pred_check
        _
      $region42: #{tpu_custom_call.1} parent=5 // pred_check_branch
        %298 = sbr.rel (%p295) target = $region44
      $region43: #{tpu_custom_call.1} parent=5 // pred_region
        %s299 = ssub.s32 %s22, 1
        %s300 = sand.u32 %s49, 1
        %s301 = scalar_lea.sflag [#allocation4], %s300
        %s302 = sand.u32 %s49, 1
        %s303 = smul.addr %s302, 64
        %s304 = scalar_lea.vmem [#allocation3], %s303
        // Predicated region
        $region45: #{tpu_custom_call.1} parent=43 // pred_check
          %p305 = pneg %p62
        $region46: #{tpu_custom_call.1} parent=43 // pred_check_branch
          %307 = sbr.rel (%p305) target = $region48
        $region47: #{tpu_custom_call.1} parent=43 // pred_region
          %308 = dma.done %s301, 1024
        $region48: #{tpu_custom_call.1} parent=43 // pred_fallthru
          _
        %s309 = sand.u32 %s27, 1
        %s310 = scalar_lea.sflag [#allocation7], %s309
        %s311 = sand.u32 %s75, 1
        %s312 = smul.addr %s311, 64
        %s313 = scalar_lea.vmem [#allocation6], %s312
        // Predicated region
        $region49: #{tpu_custom_call.1} parent=43 // pred_check
          %p314 = pneg %p88
        $region50: #{tpu_custom_call.1} parent=43 // pred_check_branch
          %316 = sbr.rel (%p314) target = $region52
        $region51: #{tpu_custom_call.1} parent=43 // pred_region
          %317 = dma.done %s310, 1024
        $region52: #{tpu_custom_call.1} parent=43 // pred_fallthru
          _
        // Predicated region
        $region53: #{tpu_custom_call.1} parent=43 // pred_check
          %p318 = pneg %p109
        $region54: #{tpu_custom_call.1} parent=43 // pred_check_branch
          %320 = sbr.rel (%p318) target = $region56
        $region55: #{tpu_custom_call.1} parent=43 // pred_region
          %321 = dma.done [#allocation7], 2048
        $region56: #{tpu_custom_call.1} parent=43 // pred_fallthru
          _
        // Predicated region
        $region57: #{tpu_custom_call.1} parent=43 // pred_check
          %p322 = pneg %p151
        $region58: #{tpu_custom_call.1} parent=43 // pred_check_branch
          %324 = sbr.rel (%p322) target = $region60
        $region59: #{tpu_custom_call.1} parent=43 // pred_region
          %325 = dma.done [#allocation10], 2048
        $region60: #{tpu_custom_call.1} parent=43 // pred_fallthru
          _
        %s326 = sand.u32 %s49, 1
        %s327 = scalar_lea.sflag [#allocation4], %s326
        %s328 = sand.u32 %s49, 1
        %s329 = smul.addr %s328, 64
        %s330 = scalar_lea.vmem [#allocation3], %s329
        %p331 = pneg %p62
        %p332 = pneg %p59
        %s333 = sand.u32 %s27, 1
        %s334 = scalar_lea.sflag [#allocation7], %s333
        %s335 = sand.u32 %s75, 1
        %s336 = smul.addr %s335, 64
        %s337 = scalar_lea.vmem [#allocation6], %s336
        %p338 = pneg %p88
        %p339 = pneg %p85
        %p340 = pneg %p109
        %p341 = pneg %p106
        %p342 = pneg %p130
        %p343 = pneg %p127
        %p344 = pneg %p151
        %p345 = pneg %p148
        %p346 = pneg %p172
        %p347 = pneg %p169
        %p348 = pneg %p198
        %p349 = pneg %p195
        %s350 = sand.u32 %s185, 1
        %s351 = scalar_lea.sflag [#allocation5], %s350
        %s352 = sand.u32 %s185, 1
        %s353 = smul.addr %s352, 128
        %s354 = scalar_lea.vmem [#allocation11], %s353
        %s355 = smul.u32 16, %s31
        %s356 = smul.u32 16, %s32
        %s357 = smul.u32 16, %s31
        %p359 = scmp.eq.s32.totalorder %s32, 0
        // Predicated region
        $region61: #{tpu_custom_call.1} parent=43 // pred_check
          %p360 = pneg %p359
        $region62: #{tpu_custom_call.1} parent=43 // pred_check_branch
          %362 = sbr.rel (%p360) target = $region64
        $region63: #{tpu_custom_call.1} parent=43 // pred_region
          %363 = vst [vmem:[#allocation2] sm:$0xff] 0.0
          %364 = vst [vmem:[#allocation2 + $0x8] sm:$0xff] 0.0
          %365 = vst [vmem:[#allocation2 + $0x10] sm:$0xff] 0.0
          %366 = vst [vmem:[#allocation2 + $0x18] sm:$0xff] 0.0
          %367 = vst [vmem:[#allocation2 + $0x20] sm:$0xff] 0.0
          %368 = vst [vmem:[#allocation2 + $0x28] sm:$0xff] 0.0
          %369 = vst [vmem:[#allocation2 + $0x30] sm:$0xff] 0.0
          %370 = vst [vmem:[#allocation2 + $0x38] sm:$0xff] 0.0
          %371 = vst [vmem:[#allocation2 + $0x40] sm:$0xff] 0.0
          %372 = vst [vmem:[#allocation2 + $0x48] sm:$0xff] 0.0
          %373 = vst [vmem:[#allocation2 + $0x50] sm:$0xff] 0.0
          %374 = vst [vmem:[#allocation2 + $0x58] sm:$0xff] 0.0
          %375 = vst [vmem:[#allocation2 + $0x60] sm:$0xff] 0.0
          %376 = vst [vmem:[#allocation2 + $0x68] sm:$0xff] 0.0
          %377 = vst [vmem:[#allocation2 + $0x70] sm:$0xff] 0.0
          %378 = vst [vmem:[#allocation2 + $0x78] sm:$0xff] 0.0
        $region64: #{tpu_custom_call.1} parent=43 // pred_fallthru
          _
        %v379 = vld [vmem:[#allocation2] sm:$0xff]
        %v380 = vld [vmem:[#allocation2 + $0x8] sm:$0xff]
        %v381 = vld [vmem:[#allocation2 + $0x10] sm:$0xff]
        %v382 = vld [vmem:[#allocation2 + $0x18] sm:$0xff]
        %v383 = vld [vmem:[#allocation2 + $0x20] sm:$0xff]
        %v384 = vld [vmem:[#allocation2 + $0x28] sm:$0xff]
        %v385 = vld [vmem:[#allocation2 + $0x30] sm:$0xff]
        %v386 = vld [vmem:[#allocation2 + $0x38] sm:$0xff]
        %v387 = vld [vmem:[#allocation2 + $0x40] sm:$0xff]
        %v388 = vld [vmem:[#allocation2 + $0x48] sm:$0xff]
        %v389 = vld [vmem:[#allocation2 + $0x50] sm:$0xff]
        %v390 = vld [vmem:[#allocation2 + $0x58] sm:$0xff]
        %v391 = vld [vmem:[#allocation2 + $0x60] sm:$0xff]
        %v392 = vld [vmem:[#allocation2 + $0x68] sm:$0xff]
        %v393 = vld [vmem:[#allocation2 + $0x70] sm:$0xff]
        %v394 = vld [vmem:[#allocation2 + $0x78] sm:$0xff]
        %v395 = vld [vmem:[%s304] sm:$0xf]
        %v396 = vld [vmem:[%s304 + $0x4] sm:$0xf]
        %v397 = vld [vmem:[%s304 + $0x8] sm:$0xf]
        %v398 = vld [vmem:[%s304 + $0xc] sm:$0xf]
        %v399 = vld [vmem:[%s304 + $0x10] sm:$0xf]
        %v400 = vld [vmem:[%s304 + $0x14] sm:$0xf]
        %v401 = vld [vmem:[%s304 + $0x18] sm:$0xf]
        %v402 = vld [vmem:[%s304 + $0x1c] sm:$0xf]
        %v403 = vld [vmem:[%s304 + $0x20] sm:$0xf]
        %v404 = vld [vmem:[%s304 + $0x24] sm:$0xf]
        %v405 = vld [vmem:[%s304 + $0x28] sm:$0xf]
        %v406 = vld [vmem:[%s304 + $0x2c] sm:$0xf]
        %v407 = vld [vmem:[%s304 + $0x30] sm:$0xf]
        %v408 = vld [vmem:[%s304 + $0x34] sm:$0xf]
        %v409 = vld [vmem:[%s304 + $0x38] sm:$0xf]
        %v410 = vld [vmem:[%s304 + $0x3c] sm:$0xf]
        %v411 = vld [vmem:[%s313] sm:$0xf]
        %v412 = vld [vmem:[%s313 + $0x4] sm:$0xf]
        %v413 = vld [vmem:[%s313 + $0x8] sm:$0xf]
        %v414 = vld [vmem:[%s313 + $0xc] sm:$0xf]
        %v415 = vld [vmem:[%s313 + $0x10] sm:$0xf]
        %v416 = vld [vmem:[%s313 + $0x14] sm:$0xf]
        %v417 = vld [vmem:[%s313 + $0x18] sm:$0xf]
        %v418 = vld [vmem:[%s313 + $0x1c] sm:$0xf]
        %v419 = vld [vmem:[%s313 + $0x20] sm:$0xf]
        %v420 = vld [vmem:[%s313 + $0x24] sm:$0xf]
        %v421 = vld [vmem:[%s313 + $0x28] sm:$0xf]
        %v422 = vld [vmem:[%s313 + $0x2c] sm:$0xf]
        %v423 = vld [vmem:[%s313 + $0x30] sm:$0xf]
        %v424 = vld [vmem:[%s313 + $0x34] sm:$0xf]
        %v425 = vld [vmem:[%s313 + $0x38] sm:$0xf]
        %v426 = vld [vmem:[%s313 + $0x3c] sm:$0xf]
        %v443 = vunpack.c.l.b16 %v395
        %v444 = vunpack.c.l.b16 %v396
        %v445 = vunpack.c.l.b16 %v397
        %v446 = vunpack.c.l.b16 %v398
        %v447 = vunpack.c.l.b16 %v399
        %v448 = vunpack.c.l.b16 %v400
        %v449 = vunpack.c.l.b16 %v401
        %v450 = vunpack.c.l.b16 %v402
        %v451 = vunpack.c.l.b16 %v403
        %v452 = vunpack.c.l.b16 %v404
        %v453 = vunpack.c.l.b16 %v405
        %v454 = vunpack.c.l.b16 %v406
        %v455 = vunpack.c.l.b16 %v407
        %v456 = vunpack.c.l.b16 %v408
        %v457 = vunpack.c.l.b16 %v409
        %v458 = vunpack.c.l.b16 %v410
        %v459 = vpack.c.b16 %v444, %v443
        %v460 = vpack.c.b16 %v446, %v445
        %v461 = vpack.c.b16 %v448, %v447
        %v462 = vpack.c.b16 %v450, %v449
        %v463 = vpack.c.b16 %v452, %v451
        %v464 = vpack.c.b16 %v454, %v453
        %v465 = vpack.c.b16 %v456, %v455
        %v466 = vpack.c.b16 %v458, %v457
        %v491 = vunpack.c.l.b16 %v411
        %v492 = vunpack.c.l.b16 %v412
        %v493 = vunpack.c.l.b16 %v413
        %v494 = vunpack.c.l.b16 %v414
        %v495 = vunpack.c.l.b16 %v415
        %v496 = vunpack.c.l.b16 %v416
        %v497 = vunpack.c.l.b16 %v417
        %v498 = vunpack.c.l.b16 %v418
        %v499 = vunpack.c.l.b16 %v419
        %v500 = vunpack.c.l.b16 %v420
        %v501 = vunpack.c.l.b16 %v421
        %v502 = vunpack.c.l.b16 %v422
        %v503 = vunpack.c.l.b16 %v423
        %v504 = vunpack.c.l.b16 %v424
        %v505 = vunpack.c.l.b16 %v425
        %v506 = vunpack.c.l.b16 %v426
        %v507 = vpack.c.b16 %v492, %v491
        %v508 = vpack.c.b16 %v494, %v493
        %v509 = vpack.c.b16 %v496, %v495
        %v510 = vpack.c.b16 %v498, %v497
        %v511 = vpack.c.b16 %v500, %v499
        %v512 = vpack.c.b16 %v502, %v501
        %v513 = vpack.c.b16 %v504, %v503
        %v514 = vpack.c.b16 %v506, %v505
        %523 = vmatprep.subr.bf16.mxu0 0
        %524 = vmatpush1.bf16.msra.mxu0 %v507
        %525 = vmatprep.subr.bf16.mxu0 0
        %526 = vmatpush1.bf16.msra.mxu0 %v508
        %527 = vmatprep.subr.bf16.mxu0 0
        %528 = vmatpush1.bf16.msra.mxu0 %v509
        %529 = vmatprep.subr.bf16.mxu0 0
        %530 = vmatpush1.bf16.msra.mxu0 %v510
        %531 = vmatprep.subr.bf16.mxu0 0
        %532 = vmatpush1.bf16.msra.mxu0 %v511
        %533 = vmatprep.subr.bf16.mxu0 0
        %534 = vmatpush1.bf16.msra.mxu0 %v512
        %535 = vmatprep.subr.bf16.mxu0 0
        %536 = vmatpush1.bf16.msra.mxu0 %v513
        %537 = vmatprep.subr.bf16.mxu0 0
        %538 = vmatpush1.bf16.msra.mxu0 %v514
        %539 = vmatprep.subr.bf16.mxu0 0
        %540 = vmatpush1.bf16.msra.mxu0 0
        %541 = vmatprep.subr.bf16.mxu0 0
        %542 = vmatpush1.bf16.msra.mxu0 0
        %543 = vmatprep.subr.bf16.mxu0 0
        %544 = vmatpush1.bf16.msra.mxu0 0
        %545 = vmatprep.subr.bf16.mxu0 0
        %546 = vmatpush1.bf16.msra.mxu0 0
        %547 = vmatprep.subr.bf16.mxu0 0
        %548 = vmatpush1.bf16.msra.mxu0 0
        %549 = vmatprep.subr.bf16.mxu0 0
        %550 = vmatpush1.bf16.msra.mxu0 0
        %551 = vmatprep.subr.bf16.mxu0 0
        %552 = vmatpush1.bf16.msra.mxu0 0
        %553 = vmatprep.subr.bf16.mxu0 0
        %554 = vmatpush1.bf16.msra.mxu0 0
        %555 = vmatprep.mubr.bf16.mxu0 0
        %556 = vmatmul.mubr.bf16.gmra.mrb[0].mxu0 %v459
        %v557 = vpop.f32.mrb[0].mxu0
        %v558 = vadd.f32 0.0, %v557
        %v559 = vpop.f32.mrb[0].mxu0
        %v560 = vpop.f32.mrb[0].mxu0
        %v561 = vadd.f32 0.0, %v560
        %v562 = vpop.f32.mrb[0].mxu0
        %563 = vmatprep.mubr.bf16.mxu0 0
        %564 = vmatmul.mubr.bf16.gmra.mrb[0].mxu0 %v460
        %v565 = vpop.f32.mrb[0].mxu0
        %v566 = vadd.f32 0.0, %v565
        %v567 = vpop.f32.mrb[0].mxu0
        %v568 = vpop.f32.mrb[0].mxu0
        %v569 = vadd.f32 0.0, %v568
        %v570 = vpop.f32.mrb[0].mxu0
        %571 = vmatprep.mubr.bf16.mxu0 0
        %572 = vmatmul.mubr.bf16.gmra.mrb[0].mxu0 %v461
        %v573 = vpop.f32.mrb[0].mxu0
        %v574 = vadd.f32 0.0, %v573
        %v575 = vpop.f32.mrb[0].mxu0
        %v576 = vpop.f32.mrb[0].mxu0
        %v577 = vadd.f32 0.0, %v576
        %v578 = vpop.f32.mrb[0].mxu0
        %579 = vmatprep.mubr.bf16.mxu0 0
        %580 = vmatmul.mubr.bf16.gmra.mrb[0].mxu0 %v462
        %v581 = vpop.f32.mrb[0].mxu0
        %v582 = vadd.f32 0.0, %v581
        %v583 = vpop.f32.mrb[0].mxu0
        %v584 = vpop.f32.mrb[0].mxu0
        %v585 = vadd.f32 0.0, %v584
        %v586 = vpop.f32.mrb[0].mxu0
        %587 = vmatprep.mubr.bf16.mxu0 0
        %588 = vmatmul.mubr.bf16.gmra.mrb[0].mxu0 %v463
        %v589 = vpop.f32.mrb[0].mxu0
        %v590 = vadd.f32 0.0, %v589
        %v591 = vpop.f32.mrb[0].mxu0
        %v592 = vpop.f32.mrb[0].mxu0
        %v593 = vadd.f32 0.0, %v592
        %v594 = vpop.f32.mrb[0].mxu0
        %595 = vmatprep.mubr.bf16.mxu0 0
        %596 = vmatmul.mubr.bf16.gmra.mrb[0].mxu0 %v464
        %v597 = vpop.f32.mrb[0].mxu0
        %v598 = vadd.f32 0.0, %v597
        %v599 = vpop.f32.mrb[0].mxu0
        %v600 = vpop.f32.mrb[0].mxu0
        %v601 = vadd.f32 0.0, %v600
        %v602 = vpop.f32.mrb[0].mxu0
        %603 = vmatprep.mubr.bf16.mxu0 0
        %604 = vmatmul.mubr.bf16.gmra.mrb[0].mxu0 %v465
        %v605 = vpop.f32.mrb[0].mxu0
        %v606 = vadd.f32 0.0, %v605
        %v607 = vpop.f32.mrb[0].mxu0
        %v608 = vpop.f32.mrb[0].mxu0
        %v609 = vadd.f32 0.0, %v608
        %v610 = vpop.f32.mrb[0].mxu0
        %611 = vmatprep.mubr.bf16.mxu0 0
        %612 = vmatmul.mubr.bf16.gmra.mrb[0].mxu0 %v466
        %v613 = vpop.f32.mrb[0].mxu0
        %v614 = vadd.f32 0.0, %v613
        %v615 = vpop.f32.mrb[0].mxu0
        %v616 = vpop.f32.mrb[0].mxu0
        %v617 = vadd.f32 0.0, %v616
        %v618 = vpop.f32.mrb[0].mxu0
        %619 = vdwg.mxu0
        %v620 = vadd.f32 %v379, %v558
        %v621 = vadd.f32 %v380, %v561
        %v622 = vadd.f32 %v381, %v566
        %v623 = vadd.f32 %v382, %v569
        %v624 = vadd.f32 %v383, %v574
        %v625 = vadd.f32 %v384, %v577
        %v626 = vadd.f32 %v385, %v582
        %v627 = vadd.f32 %v386, %v585
        %v628 = vadd.f32 %v387, %v590
        %v629 = vadd.f32 %v388, %v593
        %v630 = vadd.f32 %v389, %v598
        %v631 = vadd.f32 %v390, %v601
        %v632 = vadd.f32 %v391, %v606
        %v633 = vadd.f32 %v392, %v609
        %v634 = vadd.f32 %v393, %v614
        %v635 = vadd.f32 %v394, %v617
        %636 = vst [vmem:[#allocation2] sm:$0xff] %v620
        %637 = vst [vmem:[#allocation2 + $0x8] sm:$0xff] %v621
        %638 = vst [vmem:[#allocation2 + $0x10] sm:$0xff] %v622
        %639 = vst [vmem:[#allocation2 + $0x18] sm:$0xff] %v623
        %640 = vst [vmem:[#allocation2 + $0x20] sm:$0xff] %v624
        %641 = vst [vmem:[#allocation2 + $0x28] sm:$0xff] %v625
        %642 = vst [vmem:[#allocation2 + $0x30] sm:$0xff] %v626
        %643 = vst [vmem:[#allocation2 + $0x38] sm:$0xff] %v627
        %644 = vst [vmem:[#allocation2 + $0x40] sm:$0xff] %v628
        %645 = vst [vmem:[#allocation2 + $0x48] sm:$0xff] %v629
        %646 = vst [vmem:[#allocation2 + $0x50] sm:$0xff] %v630
        %647 = vst [vmem:[#allocation2 + $0x58] sm:$0xff] %v631
        %648 = vst [vmem:[#allocation2 + $0x60] sm:$0xff] %v632
        %649 = vst [vmem:[#allocation2 + $0x68] sm:$0xff] %v633
        %650 = vst [vmem:[#allocation2 + $0x70] sm:$0xff] %v634
        %651 = vst [vmem:[#allocation2 + $0x78] sm:$0xff] %v635
        %p652 = scmp.eq.s32.totalorder %s32, 1
        // Predicated region
        $region65: #{tpu_custom_call.1} parent=43 // pred_check
          %p653 = pneg %p652
        $region66: #{tpu_custom_call.1} parent=43 // pred_check_branch
          %655 = sbr.rel (%p653) target = $region68
        $region67: #{tpu_custom_call.1} parent=43 // pred_region
          %v656 = vld [vmem:[#allocation2] sm:$0xff]
          %v657 = vld [vmem:[#allocation2 + $0x8] sm:$0xff]
          %v658 = vld [vmem:[#allocation2 + $0x10] sm:$0xff]
          %v659 = vld [vmem:[#allocation2 + $0x18] sm:$0xff]
          %v660 = vld [vmem:[#allocation2 + $0x20] sm:$0xff]
          %v661 = vld [vmem:[#allocation2 + $0x28] sm:$0xff]
          %v662 = vld [vmem:[#allocation2 + $0x30] sm:$0xff]
          %v663 = vld [vmem:[#allocation2 + $0x38] sm:$0xff]
          %v664 = vld [vmem:[#allocation2 + $0x40] sm:$0xff]
          %v665 = vld [vmem:[#allocation2 + $0x48] sm:$0xff]
          %v666 = vld [vmem:[#allocation2 + $0x50] sm:$0xff]
          %v667 = vld [vmem:[#allocation2 + $0x58] sm:$0xff]
          %v668 = vld [vmem:[#allocation2 + $0x60] sm:$0xff]
          %v669 = vld [vmem:[#allocation2 + $0x68] sm:$0xff]
          %v670 = vld [vmem:[#allocation2 + $0x70] sm:$0xff]
          %v671 = vld [vmem:[#allocation2 + $0x78] sm:$0xff]
          %v672 = vld [vmem:[#allocation8] sm:$0xff]
          %v673 = vld [vmem:[#allocation8 + $0x8] sm:$0xff]
          %v674 = vld [vmem:[#allocation8 + $0x10] sm:$0xff]
          %v675 = vld [vmem:[#allocation8 + $0x18] sm:$0xff]
          %v676 = vld [vmem:[#allocation8 + $0x20] sm:$0xff]
          %v677 = vld [vmem:[#allocation8 + $0x28] sm:$0xff]
          %v678 = vld [vmem:[#allocation8 + $0x30] sm:$0xff]
          %v679 = vld [vmem:[#allocation8 + $0x38] sm:$0xff]
          %v680 = vld [vmem:[#allocation8 + $0x40] sm:$0xff]
          %v681 = vld [vmem:[#allocation8 + $0x48] sm:$0xff]
          %v682 = vld [vmem:[#allocation8 + $0x50] sm:$0xff]
          %v683 = vld [vmem:[#allocation8 + $0x58] sm:$0xff]
          %v684 = vld [vmem:[#allocation8 + $0x60] sm:$0xff]
          %v685 = vld [vmem:[#allocation8 + $0x68] sm:$0xff]
          %v686 = vld [vmem:[#allocation8 + $0x70] sm:$0xff]
          %v687 = vld [vmem:[#allocation8 + $0x78] sm:$0xff]
          %v688 = vld [vmem:[%s3] sm:$0x1]
          %v690 = vlaneseq
          %v691 = vshrl.u32 %v690, 7
          %v692 = vsub.s32 0, %v691
          %v693 = vrot.slane %v688, %v692
          %695 = vmatprep.subr.mxu0 0.0
          %696 = vmatpush1.msra.mxu0 %v672
          %697 = vmatprep.subr.mxu0 0.0
          %698 = vmatpush1.msra.mxu0 %v673
          %699 = vmatprep.subr.mxu0 0.0
          %700 = vmatpush1.msra.mxu0 %v674
          %701 = vmatprep.subr.mxu0 0.0
          %702 = vmatpush1.msra.mxu0 %v675
          %703 = vmatprep.subr.mxu0 0.0
          %704 = vmatpush1.msra.mxu0 %v676
          %705 = vmatprep.subr.mxu0 0.0
          %706 = vmatpush1.msra.mxu0 %v677
          %707 = vmatprep.subr.mxu0 0.0
          %708 = vmatpush1.msra.mxu0 %v678
          %709 = vmatprep.subr.mxu0 0.0
          %710 = vmatpush1.msra.mxu0 %v679
          %711 = vmatprep.subr.mxu0 0.0
          %712 = vmatpush1.msra.mxu0 %v680
          %713 = vmatprep.subr.mxu0 0.0
          %714 = vmatpush1.msra.mxu0 %v681
          %715 = vmatprep.subr.mxu0 0.0
          %716 = vmatpush1.msra.mxu0 %v682
          %717 = vmatprep.subr.mxu0 0.0
          %718 = vmatpush1.msra.mxu0 %v683
          %719 = vmatprep.subr.mxu0 0.0
          %720 = vmatpush1.msra.mxu0 %v684
          %721 = vmatprep.subr.mxu0 0.0
          %722 = vmatpush1.msra.mxu0 %v685
          %723 = vmatprep.subr.mxu0 0.0
          %724 = vmatpush1.msra.mxu0 %v686
          %725 = vmatprep.subr.mxu0 0.0
          %726 = vmatpush1.msra.mxu0 %v687
          %727 = vmatprep.subr.mxu0 0.0
          %728 = vmatpush1.msra.mxu0 0.0
          %729 = vmatprep.subr.mxu0 0.0
          %730 = vmatpush1.msra.mxu0 0.0
          %731 = vmatprep.subr.mxu0 0.0
          %732 = vmatpush1.msra.mxu0 0.0
          %733 = vmatprep.subr.mxu0 0.0
          %734 = vmatpush1.msra.mxu0 0.0
          %735 = vmatprep.subr.mxu0 0.0
          %736 = vmatpush1.msra.mxu0 0.0
          %737 = vmatprep.subr.mxu0 0.0
          %738 = vmatpush1.msra.mxu0 0.0
          %739 = vmatprep.subr.mxu0 0.0
          %740 = vmatpush1.msra.mxu0 0.0
          %741 = vmatprep.subr.mxu0 0.0
          %742 = vmatpush1.msra.mxu0 0.0
          %743 = vmatprep.subr.mxu0 0.0
          %744 = vmatpush1.msra.mxu0 0.0
          %745 = vmatprep.subr.mxu0 0.0
          %746 = vmatpush1.msra.mxu0 0.0
          %747 = vmatprep.subr.mxu0 0.0
          %748 = vmatpush1.msra.mxu0 0.0
          %749 = vmatprep.subr.mxu0 0.0
          %750 = vmatpush1.msra.mxu0 0.0
          %751 = vmatprep.subr.mxu0 0.0
          %752 = vmatpush1.msra.mxu0 0.0
          %753 = vmatprep.subr.mxu0 0.0
          %754 = vmatpush1.msra.mxu0 0.0
          %755 = vmatprep.subr.mxu0 0.0
          %756 = vmatpush1.msra.mxu0 0.0
          %757 = vmatprep.subr.mxu0 0.0
          %758 = vmatpush1.msra.mxu0 0.0
          %759 = vmatprep.mubr.f32.mxu0 0.0
          %760 = vmatmul.mubr.f32.gmra.mrb[0].mxu0 %v656
          %v761 = vpop.f32.mrb[0].mxu0
          %v762 = vadd.f32 %v693, %v761
          %v763 = vpop.f32.mrb[0].mxu0
          %764 = vmatprep.mubr.f32.mxu0 0.0
          %765 = vmatmul.mubr.f32.gmra.mrb[0].mxu0 %v657
          %v766 = vpop.f32.mrb[0].mxu0
          %v767 = vadd.f32 %v693, %v766
          %v768 = vpop.f32.mrb[0].mxu0
          %769 = vmatprep.mubr.f32.mxu0 0.0
          %770 = vmatmul.mubr.f32.gmra.mrb[0].mxu0 %v658
          %v771 = vpop.f32.mrb[0].mxu0
          %v772 = vadd.f32 %v693, %v771
          %v773 = vpop.f32.mrb[0].mxu0
          %774 = vmatprep.mubr.f32.mxu0 0.0
          %775 = vmatmul.mubr.f32.gmra.mrb[0].mxu0 %v659
          %v776 = vpop.f32.mrb[0].mxu0
          %v777 = vadd.f32 %v693, %v776
          %v778 = vpop.f32.mrb[0].mxu0
          %779 = vmatprep.mubr.f32.mxu0 0.0
          %780 = vmatmul.mubr.f32.gmra.mrb[0].mxu0 %v660
          %v781 = vpop.f32.mrb[0].mxu0
          %v782 = vadd.f32 %v693, %v781
          %v783 = vpop.f32.mrb[0].mxu0
          %784 = vmatprep.mubr.f32.mxu0 0.0
          %785 = vmatmul.mubr.f32.gmra.mrb[0].mxu0 %v661
          %v786 = vpop.f32.mrb[0].mxu0
          %v787 = vadd.f32 %v693, %v786
          %v788 = vpop.f32.mrb[0].mxu0
          %789 = vmatprep.mubr.f32.mxu0 0.0
          %790 = vmatmul.mubr.f32.gmra.mrb[0].mxu0 %v662
          %v791 = vpop.f32.mrb[0].mxu0
          %v792 = vadd.f32 %v693, %v791
          %v793 = vpop.f32.mrb[0].mxu0
          %794 = vmatprep.mubr.f32.mxu0 0.0
          %795 = vmatmul.mubr.f32.gmra.mrb[0].mxu0 %v663
          %v796 = vpop.f32.mrb[0].mxu0
          %v797 = vadd.f32 %v693, %v796
          %v798 = vpop.f32.mrb[0].mxu0
          %799 = vmatprep.mubr.f32.mxu0 0.0
          %800 = vmatmul.mubr.f32.gmra.mrb[0].mxu0 %v664
          %v801 = vpop.f32.mrb[0].mxu0
          %v802 = vadd.f32 %v693, %v801
          %v803 = vpop.f32.mrb[0].mxu0
          %804 = vmatprep.mubr.f32.mxu0 0.0
          %805 = vmatmul.mubr.f32.gmra.mrb[0].mxu0 %v665
          %v806 = vpop.f32.mrb[0].mxu0
          %v807 = vadd.f32 %v693, %v806
          %v808 = vpop.f32.mrb[0].mxu0
          %809 = vmatprep.mubr.f32.mxu0 0.0
          %810 = vmatmul.mubr.f32.gmra.mrb[0].mxu0 %v666
          %v811 = vpop.f32.mrb[0].mxu0
          %v812 = vadd.f32 %v693, %v811
          %v813 = vpop.f32.mrb[0].mxu0
          %814 = vmatprep.mubr.f32.mxu0 0.0
          %815 = vmatmul.mubr.f32.gmra.mrb[0].mxu0 %v667
          %v816 = vpop.f32.mrb[0].mxu0
          %v817 = vadd.f32 %v693, %v816
          %v818 = vpop.f32.mrb[0].mxu0
          %819 = vmatprep.mubr.f32.mxu0 0.0
          %820 = vmatmul.mubr.f32.gmra.mrb[0].mxu0 %v668
          %v821 = vpop.f32.mrb[0].mxu0
          %v822 = vadd.f32 %v693, %v821
          %v823 = vpop.f32.mrb[0].mxu0
          %824 = vmatprep.mubr.f32.mxu0 0.0
          %825 = vmatmul.mubr.f32.gmra.mrb[0].mxu0 %v669
          %v826 = vpop.f32.mrb[0].mxu0
          %v827 = vadd.f32 %v693, %v826
          %v828 = vpop.f32.mrb[0].mxu0
          %829 = vmatprep.mubr.f32.mxu0 0.0
          %830 = vmatmul.mubr.f32.gmra.mrb[0].mxu0 %v670
          %v831 = vpop.f32.mrb[0].mxu0
          %v832 = vadd.f32 %v693, %v831
          %v833 = vpop.f32.mrb[0].mxu0
          %834 = vmatprep.mubr.f32.mxu0 0.0
          %835 = vmatmul.mubr.f32.gmra.mrb[0].mxu0 %v671
          %v836 = vpop.f32.mrb[0].mxu0
          %v837 = vadd.f32 %v693, %v836
          %v838 = vpop.f32.mrb[0].mxu0
          %839 = vdwg.mxu0
          %vm840 = vcmp.ge.f32.partialorder %v762, 0.0
          %vm841 = vcmp.ge.f32.partialorder %v767, 0.0
          %vm842 = vcmp.ge.f32.partialorder %v772, 0.0
          %vm843 = vcmp.ge.f32.partialorder %v777, 0.0
          %vm844 = vcmp.ge.f32.partialorder %v782, 0.0
          %vm845 = vcmp.ge.f32.partialorder %v787, 0.0
          %vm846 = vcmp.ge.f32.partialorder %v792, 0.0
          %vm847 = vcmp.ge.f32.partialorder %v797, 0.0
          %vm848 = vcmp.ge.f32.partialorder %v802, 0.0
          %vm849 = vcmp.ge.f32.partialorder %v807, 0.0
          %vm850 = vcmp.ge.f32.partialorder %v812, 0.0
          %vm851 = vcmp.ge.f32.partialorder %v817, 0.0
          %vm852 = vcmp.ge.f32.partialorder %v822, 0.0
          %vm853 = vcmp.ge.f32.partialorder %v827, 0.0
          %vm854 = vcmp.ge.f32.partialorder %v832, 0.0
          %vm855 = vcmp.ge.f32.partialorder %v837, 0.0
          %v856 = vmul.f32 %v762, 0.1
          %v857 = vmul.f32 %v767, 0.1
          %v858 = vmul.f32 %v772, 0.1
          %v859 = vmul.f32 %v777, 0.1
          %v860 = vmul.f32 %v782, 0.1
          %v861 = vmul.f32 %v787, 0.1
          %v862 = vmul.f32 %v792, 0.1
          %v863 = vmul.f32 %v797, 0.1
          %v864 = vmul.f32 %v802, 0.1
          %v865 = vmul.f32 %v807, 0.1
          %v866 = vmul.f32 %v812, 0.1
          %v867 = vmul.f32 %v817, 0.1
          %v868 = vmul.f32 %v822, 0.1
          %v869 = vmul.f32 %v827, 0.1
          %v870 = vmul.f32 %v832, 0.1
          %v871 = vmul.f32 %v837, 0.1
          %v872 = vsel %vm840, %v762, %v856
          %v873 = vsel %vm841, %v767, %v857
          %v874 = vsel %vm842, %v772, %v858
          %v875 = vsel %vm843, %v777, %v859
          %v876 = vsel %vm844, %v782, %v860
          %v877 = vsel %vm845, %v787, %v861
          %v878 = vsel %vm846, %v792, %v862
          %v879 = vsel %vm847, %v797, %v863
          %v880 = vsel %vm848, %v802, %v864
          %v881 = vsel %vm849, %v807, %v865
          %v882 = vsel %vm850, %v812, %v866
          %v883 = vsel %vm851, %v817, %v867
          %v884 = vsel %vm852, %v822, %v868
          %v885 = vsel %vm853, %v827, %v869
          %v886 = vsel %vm854, %v832, %v870
          %v887 = vsel %vm855, %v837, %v871
          %v888 = vld [vmem:[#allocation9] sm:$0xff]
          %v889 = vld [vmem:[#allocation9 + $0x8] sm:$0xff]
          %v890 = vld [vmem:[#allocation9 + $0x10] sm:$0xff]
          %v891 = vld [vmem:[#allocation9 + $0x18] sm:$0xff]
          %v892 = vld [vmem:[#allocation9 + $0x20] sm:$0xff]
          %v893 = vld [vmem:[#allocation9 + $0x28] sm:$0xff]
          %v894 = vld [vmem:[#allocation9 + $0x30] sm:$0xff]
          %v895 = vld [vmem:[#allocation9 + $0x38] sm:$0xff]
          %v896 = vld [vmem:[#allocation9 + $0x40] sm:$0xff]
          %v897 = vld [vmem:[#allocation9 + $0x48] sm:$0xff]
          %v898 = vld [vmem:[#allocation9 + $0x50] sm:$0xff]
          %v899 = vld [vmem:[#allocation9 + $0x58] sm:$0xff]
          %v900 = vld [vmem:[#allocation9 + $0x60] sm:$0xff]
          %v901 = vld [vmem:[#allocation9 + $0x68] sm:$0xff]
          %v902 = vld [vmem:[#allocation9 + $0x70] sm:$0xff]
          %v903 = vld [vmem:[#allocation9 + $0x78] sm:$0xff]
          %v904 = vld [vmem:[%s5] sm:$0x1]
          %v906 = vlaneseq
          %v907 = vshrl.u32 %v906, 7
          %v908 = vsub.s32 0, %v907
          %v909 = vrot.slane %v904, %v908
          %911 = vmatprep.subr.mxu0 0.0
          %912 = vmatpush1.msra.mxu0 %v888
          %913 = vmatprep.subr.mxu0 0.0
          %914 = vmatpush1.msra.mxu0 %v889
          %915 = vmatprep.subr.mxu0 0.0
          %916 = vmatpush1.msra.mxu0 %v890
          %917 = vmatprep.subr.mxu0 0.0
          %918 = vmatpush1.msra.mxu0 %v891
          %919 = vmatprep.subr.mxu0 0.0
          %920 = vmatpush1.msra.mxu0 %v892
          %921 = vmatprep.subr.mxu0 0.0
          %922 = vmatpush1.msra.mxu0 %v893
          %923 = vmatprep.subr.mxu0 0.0
          %924 = vmatpush1.msra.mxu0 %v894
          %925 = vmatprep.subr.mxu0 0.0
          %926 = vmatpush1.msra.mxu0 %v895
          %927 = vmatprep.subr.mxu0 0.0
          %928 = vmatpush1.msra.mxu0 %v896
          %929 = vmatprep.subr.mxu0 0.0
          %930 = vmatpush1.msra.mxu0 %v897
          %931 = vmatprep.subr.mxu0 0.0
          %932 = vmatpush1.msra.mxu0 %v898
          %933 = vmatprep.subr.mxu0 0.0
          %934 = vmatpush1.msra.mxu0 %v899
          %935 = vmatprep.subr.mxu0 0.0
          %936 = vmatpush1.msra.mxu0 %v900
          %937 = vmatprep.subr.mxu0 0.0
          %938 = vmatpush1.msra.mxu0 %v901
          %939 = vmatprep.subr.mxu0 0.0
          %940 = vmatpush1.msra.mxu0 %v902
          %941 = vmatprep.subr.mxu0 0.0
          %942 = vmatpush1.msra.mxu0 %v903
          %943 = vmatprep.subr.mxu0 0.0
          %944 = vmatpush1.msra.mxu0 0.0
          %945 = vmatprep.subr.mxu0 0.0
          %946 = vmatpush1.msra.mxu0 0.0
          %947 = vmatprep.subr.mxu0 0.0
          %948 = vmatpush1.msra.mxu0 0.0
          %949 = vmatprep.subr.mxu0 0.0
          %950 = vmatpush1.msra.mxu0 0.0
          %951 = vmatprep.subr.mxu0 0.0
          %952 = vmatpush1.msra.mxu0 0.0
          %953 = vmatprep.subr.mxu0 0.0
          %954 = vmatpush1.msra.mxu0 0.0
          %955 = vmatprep.subr.mxu0 0.0
          %956 = vmatpush1.msra.mxu0 0.0
          %957 = vmatprep.subr.mxu0 0.0
          %958 = vmatpush1.msra.mxu0 0.0
          %959 = vmatprep.subr.mxu0 0.0
          %960 = vmatpush1.msra.mxu0 0.0
          %961 = vmatprep.subr.mxu0 0.0
          %962 = vmatpush1.msra.mxu0 0.0
          %963 = vmatprep.subr.mxu0 0.0
          %964 = vmatpush1.msra.mxu0 0.0
          %965 = vmatprep.subr.mxu0 0.0
          %966 = vmatpush1.msra.mxu0 0.0
          %967 = vmatprep.subr.mxu0 0.0
          %968 = vmatpush1.msra.mxu0 0.0
          %969 = vmatprep.subr.mxu0 0.0
          %970 = vmatpush1.msra.mxu0 0.0
          %971 = vmatprep.subr.mxu0 0.0
          %972 = vmatpush1.msra.mxu0 0.0
          %973 = vmatprep.subr.mxu0 0.0
          %974 = vmatpush1.msra.mxu0 0.0
          %975 = vmatprep.mubr.f32.mxu0 0.0
          %976 = vmatmul.mubr.f32.gmra.mrb[0].mxu0 %v872
          %v977 = vpop.f32.mrb[0].mxu0
          %v978 = vadd.f32 %v909, %v977
          %v979 = vpop.f32.mrb[0].mxu0
          %980 = vmatprep.mubr.f32.mxu0 0.0
          %981 = vmatmul.mubr.f32.gmra.mrb[0].mxu0 %v873
          %v982 = vpop.f32.mrb[0].mxu0
          %v983 = vadd.f32 %v909, %v982
          %v984 = vpop.f32.mrb[0].mxu0
          %985 = vmatprep.mubr.f32.mxu0 0.0
          %986 = vmatmul.mubr.f32.gmra.mrb[0].mxu0 %v874
          %v987 = vpop.f32.mrb[0].mxu0
          %v988 = vadd.f32 %v909, %v987
          %v989 = vpop.f32.mrb[0].mxu0
          %990 = vmatprep.mubr.f32.mxu0 0.0
          %991 = vmatmul.mubr.f32.gmra.mrb[0].mxu0 %v875
          %v992 = vpop.f32.mrb[0].mxu0
          %v993 = vadd.f32 %v909, %v992
          %v994 = vpop.f32.mrb[0].mxu0
          %995 = vmatprep.mubr.f32.mxu0 0.0
          %996 = vmatmul.mubr.f32.gmra.mrb[0].mxu0 %v876
          %v997 = vpop.f32.mrb[0].mxu0
          %v998 = vadd.f32 %v909, %v997
          %v999 = vpop.f32.mrb[0].mxu0
          %1000 = vmatprep.mubr.f32.mxu0 0.0
          %1001 = vmatmul.mubr.f32.gmra.mrb[0].mxu0 %v877
          %v1002 = vpop.f32.mrb[0].mxu0
          %v1003 = vadd.f32 %v909, %v1002
          %v1004 = vpop.f32.mrb[0].mxu0
          %1005 = vmatprep.mubr.f32.mxu0 0.0
          %1006 = vmatmul.mubr.f32.gmra.mrb[0].mxu0 %v878
          %v1007 = vpop.f32.mrb[0].mxu0
          %v1008 = vadd.f32 %v909, %v1007
          %v1009 = vpop.f32.mrb[0].mxu0
          %1010 = vmatprep.mubr.f32.mxu0 0.0
          %1011 = vmatmul.mubr.f32.gmra.mrb[0].mxu0 %v879
          %v1012 = vpop.f32.mrb[0].mxu0
          %v1013 = vadd.f32 %v909, %v1012
          %v1014 = vpop.f32.mrb[0].mxu0
          %1015 = vmatprep.mubr.f32.mxu0 0.0
          %1016 = vmatmul.mubr.f32.gmra.mrb[0].mxu0 %v880
          %v1017 = vpop.f32.mrb[0].mxu0
          %v1018 = vadd.f32 %v909, %v1017
          %v1019 = vpop.f32.mrb[0].mxu0
          %1020 = vmatprep.mubr.f32.mxu0 0.0
          %1021 = vmatmul.mubr.f32.gmra.mrb[0].mxu0 %v881
          %v1022 = vpop.f32.mrb[0].mxu0
          %v1023 = vadd.f32 %v909, %v1022
          %v1024 = vpop.f32.mrb[0].mxu0
          %1025 = vmatprep.mubr.f32.mxu0 0.0
          %1026 = vmatmul.mubr.f32.gmra.mrb[0].mxu0 %v882
          %v1027 = vpop.f32.mrb[0].mxu0
          %v1028 = vadd.f32 %v909, %v1027
          %v1029 = vpop.f32.mrb[0].mxu0
          %1030 = vmatprep.mubr.f32.mxu0 0.0
          %1031 = vmatmul.mubr.f32.gmra.mrb[0].mxu0 %v883
          %v1032 = vpop.f32.mrb[0].mxu0
          %v1033 = vadd.f32 %v909, %v1032
          %v1034 = vpop.f32.mrb[0].mxu0
          %1035 = vmatprep.mubr.f32.mxu0 0.0
          %1036 = vmatmul.mubr.f32.gmra.mrb[0].mxu0 %v884
          %v1037 = vpop.f32.mrb[0].mxu0
          %v1038 = vadd.f32 %v909, %v1037
          %v1039 = vpop.f32.mrb[0].mxu0
          %1040 = vmatprep.mubr.f32.mxu0 0.0
          %1041 = vmatmul.mubr.f32.gmra.mrb[0].mxu0 %v885
          %v1042 = vpop.f32.mrb[0].mxu0
          %v1043 = vadd.f32 %v909, %v1042
          %v1044 = vpop.f32.mrb[0].mxu0
          %1045 = vmatprep.mubr.f32.mxu0 0.0
          %1046 = vmatmul.mubr.f32.gmra.mrb[0].mxu0 %v886
          %v1047 = vpop.f32.mrb[0].mxu0
          %v1048 = vadd.f32 %v909, %v1047
          %v1049 = vpop.f32.mrb[0].mxu0
          %1050 = vmatprep.mubr.f32.mxu0 0.0
          %1051 = vmatmul.mubr.f32.gmra.mrb[0].mxu0 %v887
          %v1052 = vpop.f32.mrb[0].mxu0
          %v1053 = vadd.f32 %v909, %v1052
          %v1054 = vpop.f32.mrb[0].mxu0
          %1055 = vdwg.mxu0
          %1056 = vst [vmem:[%s354] sm:$0xff] %v978
          %1057 = vst [vmem:[%s354 + $0x8] sm:$0xff] %v983
          %1058 = vst [vmem:[%s354 + $0x10] sm:$0xff] %v988
          %1059 = vst [vmem:[%s354 + $0x18] sm:$0xff] %v993
          %1060 = vst [vmem:[%s354 + $0x20] sm:$0xff] %v998
          %1061 = vst [vmem:[%s354 + $0x28] sm:$0xff] %v1003
          %1062 = vst [vmem:[%s354 + $0x30] sm:$0xff] %v1008
          %1063 = vst [vmem:[%s354 + $0x38] sm:$0xff] %v1013
          %1064 = vst [vmem:[%s354 + $0x40] sm:$0xff] %v1018
          %1065 = vst [vmem:[%s354 + $0x48] sm:$0xff] %v1023
          %1066 = vst [vmem:[%s354 + $0x50] sm:$0xff] %v1028
          %1067 = vst [vmem:[%s354 + $0x58] sm:$0xff] %v1033
          %1068 = vst [vmem:[%s354 + $0x60] sm:$0xff] %v1038
          %1069 = vst [vmem:[%s354 + $0x68] sm:$0xff] %v1043
          %1070 = vst [vmem:[%s354 + $0x70] sm:$0xff] %v1048
          %1071 = vst [vmem:[%s354 + $0x78] sm:$0xff] %v1053
        $region68: #{tpu_custom_call.1} parent=43 // pred_fallthru
          _
        %s1072 = sand.u32 %s185, 1
        %s1073 = scalar_lea.sflag [#allocation5], %s1072
        %s1074 = sand.u32 %s185, 1
        %s1075 = smul.addr %s1074, 128
        %s1076 = scalar_lea.vmem [#allocation11], %s1075
        // Predicated region
        $region69: #{tpu_custom_call.1} parent=43 // pred_check
          %p1077 = pneg %p195
        $region70: #{tpu_custom_call.1} parent=43 // pred_check_branch
          %1079 = sbr.rel (%p1077) target = $region72
        $region71: #{tpu_custom_call.1} parent=43 // pred_region
          %s1080 = smul.u32 16, %s31
          %s1082 = ssub.s32 2048, 2048
          %1083 = vsyncadd %s1073, %s1082
          %s1084 = smul.addr %s1080, 128
          %s1085 = scalar_lea.hbm %s6, %s1084
          %s1086 = sshll.u32 %s1076, 4
          %s1087 = int_to_ptr.vmem [resolvable:$true] %s1086
          %1092 = dma.vmem_to_hbm [thread:$0]  %s1087, 2048, %s1085, %s1073, 128, 128, 8
        $region72: #{tpu_custom_call.1} parent=43 // pred_fallthru
          _
      $region44: #{tpu_custom_call.1} parent=5 // pred_fallthru
        _
      %p1093 = scmp.le.s32.totalorder 2, %s22
      // Predicated region
      $region73: #{tpu_custom_call.1} parent=5 // pred_check
        %p1094 = pneg %p1093
      $region74: #{tpu_custom_call.1} parent=5 // pred_check_branch
        %1096 = sbr.rel (%p1094) target = $region76
      $region75: #{tpu_custom_call.1} parent=5 // pred_region
        %s1097 = ssub.s32 %s22, 2
        // Predicated region
        $region77: #{tpu_custom_call.1} parent=75 // pred_check
          %p1098 = pneg %p201
        $region78: #{tpu_custom_call.1} parent=75 // pred_check_branch
          %1100 = sbr.rel (%p1098) target = $region80
        $region79: #{tpu_custom_call.1} parent=75 // pred_region
          %s1101 = sand.u32 %s186, 1
          %s1102 = scalar_lea.sflag [#allocation5], %s1101
          %s1103 = sand.u32 %s186, 1
          %s1104 = smul.addr %s1103, 128
          %s1105 = scalar_lea.vmem [#allocation11], %s1104
          %1106 = dma.done %s1102, 2048
        $region80: #{tpu_custom_call.1} parent=75 // pred_fallthru
          _
      $region76: #{tpu_custom_call.1} parent=5 // pred_fallthru
        _
    $region6: #{tpu_custom_call.1} parent=1 // loop_footer
      %s26 = sadd.s32 1, %s22
    $region7: #{tpu_custom_call.1} parent=1 // loop_footer_branch
      %21 = sbr.rel target = $region3
    $region8: #{tpu_custom_call.1} parent=1 // loop_exit
      _
    %1107 = vsyncpa [#allocation4], 1
    %s1108 = scalar_lea.sflag [#allocation4], 1
    %1109 = vsyncpa %s1108, 1
    %1110 = vsyncpa [#allocation7], 1
    %s1111 = scalar_lea.sflag [#allocation7], 1
    %1112 = vsyncpa %s1111, 1
    %1113 = vsyncpa [#allocation10], 1
    %1114 = vsyncpa [#allocation5], 1
    %s1115 = scalar_lea.sflag [#allocation5], 1
    %1116 = vsyncpa %s1115, 1

</llo_original>
